<compile_context>
chip_gen: v7x
topology: tpu7x:2x2x1
jax: 0.10.0
libtpu: 0.0.40
codegen_flags: <defaults>
</compile_context>

<pallas_src>
import math

import jax
import jax.numpy as jnp
from jax.experimental import pallas as pl
from jax.experimental.pallas import tpu as pltpu


def _round_up(x, m):
    return ((x + m - 1) // m) * m


def _kl_partial_kernel(mu_q_ref, sig_q_ref, mu_p_ref, sig_p_ref, out_ref):
    """For the current (b_pad, tile_d) tile, writes an (8, tile_d) partial sum
    over the batch of KL(N(mu_q, sig_q) || N(mu_p, sig_p))."""
    mu_q = mu_q_ref[...].astype(jnp.float32)
    sig_q = sig_q_ref[...].astype(jnp.float32)
    mu_p = mu_p_ref[...].astype(jnp.float32)
    sig_p = sig_p_ref[...].astype(jnp.float32)

    # Same formula as torch.distributions.kl_divergence(Normal, Normal):
    #   0.5 * (var_ratio + t1 - 1 - log(var_ratio))
    # One shared reciprocal of sigma_p replaces the two divides.
    inv_p = pl.reciprocal(sig_p, approx=False)
    ratio = sig_q * inv_p
    var_ratio = ratio * ratio
    dmu = (mu_q - mu_p) * inv_p
    kl = 0.5 * (var_ratio + dmu * dmu - 1.0 - jnp.log(var_ratio))

    b_pad, tile_d = kl.shape
    if b_pad == 8:
        partial = kl
    else:
        # Fold the padded batch into groups of 8 sublanes (VPU adds only).
        partial = kl.reshape(b_pad // 8, 8, tile_d).sum(axis=0)
    out_ref[0] = partial


def _choose_tile_d(d_tot, b_pad):
    """Largest lane-dense tile that keeps the double-buffered input working
    set (4 streams x 2 buffers, f32) well inside every generation's default
    scoped-VMEM limit (v5e 16 MiB, v6e/v7x 32 MiB)."""
    budget_bytes = 4 * 1024 * 1024          # inputs only; leaves headroom
    bytes_per_col = 4 * 2 * b_pad * 4       # 4 inputs, 2 buffers, f32
    max_cols = max(128, (budget_bytes // bytes_per_col) // 128 * 128)
    max_cols = min(max_cols, 8192)
    return min(_round_up(d_tot, 128), max_cols)


def _pad_rows(x, rows, value):
    if x.shape[0] == rows:
        return x
    return jnp.pad(x, ((0, rows - x.shape[0]), (0, 0)), constant_values=value)


def hierarchical_kl_divergence_loss(model_out, batch=None):
    """JAX/Pallas equivalent of HierarchicalKLDivergenceLoss.forward.

    model_out['posteriors'] / model_out['priors'] are lists of (mu, sigma)
    tuples (diagonal Gaussians), mirroring torch.distributions.Normal usage.
    Returns a shape-(1,) float32 array, like the torch module.
    """
    posteriors = model_out.get("posteriors", [])
    priors = model_out.get("priors", [])

    # (mu_q, sig_q, mu_p, sig_p, b, d) per usable level, flattened to (B, D).
    flat_levels = []
    for posterior, prior in zip(posteriors, priors):
        if posterior is None or prior is None:
            continue
        mu_q, sig_q = posterior
        mu_p, sig_p = prior
        b = mu_q.shape[0]
        d = math.prod(mu_q.shape[1:])
        flat_levels.append((mu_q.reshape(b, d), sig_q.reshape(b, d),
                            mu_p.reshape(b, d), sig_p.reshape(b, d), b, d))

    if not flat_levels:
        return jnp.zeros((1,), dtype=jnp.float32)

    batch_sizes = [lvl[4] for lvl in flat_levels]
    b_pad = max(8, _round_up(max(batch_sizes), 8))
    same_b = all(b == batch_sizes[0] for b in batch_sizes)

    d_tot = sum(lvl[5] for lvl in flat_levels)
    tile_d = _choose_tile_d(d_tot, b_pad)
    d_tot_pad = _round_up(d_tot, tile_d)
    num_tiles = d_tot_pad // tile_d

    def _prepare(idx, pad_value):
        parts = [lvl[idx] for lvl in flat_levels]
        if not same_b:  # Rare: levels with differing batch sizes.
            parts = [_pad_rows(p, b_pad, pad_value) for p in parts]
        cat = parts[0] if len(parts) == 1 else jnp.concatenate(parts, axis=1)
        pad_r = b_pad - cat.shape[0]
        pad_c = d_tot_pad - cat.shape[1]
        if pad_r or pad_c:
            cat = jnp.pad(cat, ((0, pad_r), (0, pad_c)),
                          constant_values=pad_value)
        return cat

    # Zero-KL padding: mu_q = mu_p = 0, sigma_q = sigma_p = 1.  Inputs keep
    # their native (possibly bf16) dtype in HBM; the kernel upcasts to f32.
    mu_q_c = _prepare(0, 0.0)
    sig_q_c = _prepare(1, 1.0)
    mu_p_c = _prepare(2, 0.0)
    sig_p_c = _prepare(3, 1.0)

    in_spec = pl.BlockSpec((b_pad, tile_d), lambda i: (0, i))
    partials = pl.pallas_call(
        _kl_partial_kernel,
        out_shape=jax.ShapeDtypeStruct((num_tiles, 8, tile_d), jnp.float32),
        grid_spec=pltpu.PrefetchScalarGridSpec(
            num_scalar_prefetch=0,
            grid=(num_tiles,),
            in_specs=[in_spec, in_spec, in_spec, in_spec],
            out_specs=pl.BlockSpec((1, 8, tile_d), lambda i: (i, 0, 0)),
        ),
        compiler_params=pltpu.CompilerParams(
            dimension_semantics=("parallel",)),
    )(mu_q_c, sig_q_c, mu_p_c, sig_p_c)

    # Per-feature sums over the batch, in concatenated-column order.
    col_sums = partials.sum(axis=1).reshape(-1)  # (d_tot_pad,)

    # Per-level: sum over its features / its batch size (padding sums to 0).
    loss = jnp.zeros((), dtype=jnp.float32)
    off = 0
    for lvl in flat_levels:
        b, d = lvl[4], lvl[5]
        loss = loss + col_sums[off:off + d].sum() / jnp.float32(b)
        off += d
    return loss.reshape(1)


def _reference_loss(model_out):
    """Pure-JAX reference for validation (matches the torch module)."""
    loss = jnp.zeros((1,), dtype=jnp.float32)
    for posterior, prior in zip(model_out.get("posteriors", []),
                                model_out.get("priors", [])):
        if posterior is None or prior is None:
            continue
        mu_q, sig_q = [t.astype(jnp.float32) for t in posterior]
        mu_p, sig_p = [t.astype(jnp.float32) for t in prior]
        var_ratio = (sig_q / sig_p) ** 2
        t1 = ((mu_q - mu_p) / sig_p) ** 2
        kl = 0.5 * (var_ratio + t1 - 1.0 - jnp.log(var_ratio))
        b = kl.shape[0]
        loss = loss + kl.reshape(b, -1).sum(1).mean()
    return loss


if __name__ == "__main__":
    key = jax.random.PRNGKey(0)

    # Two hierarchy levels with NCHW-shaped latent parameter maps.
    level_shapes = [(2, 4, 16, 16), (2, 8, 8, 8)]

    posteriors = []
    priors = []
    for shape in level_shapes:
        key, k1, k2, k3, k4 = jax.random.split(key, 5)
        mu_q = jax.random.normal(k1, shape, dtype=jnp.float32)
        sig_q = jax.nn.softplus(jax.random.normal(k2, shape, dtype=jnp.float32)) + 1e-3
        mu_p = jax.random.normal(k3, shape, dtype=jnp.float32)
        sig_p = jax.nn.softplus(jax.random.normal(k4, shape, dtype=jnp.float32)) + 1e-3
        posteriors.append((mu_q, sig_q))
        priors.append((mu_p, sig_p))

    # Include a None pair to exercise the skip path, like the torch module.
    posteriors.append(None)
    priors.append(None)

    model_out = {"posteriors": posteriors, "priors": priors}
    batch = {}

    loss = hierarchical_kl_divergence_loss(model_out, batch)
    loss = jax.block_until_ready(loss)

    ref = _reference_loss(model_out)
    assert loss.shape == (1,)
    assert jnp.allclose(loss, ref, rtol=1e-4, atol=1e-4), (loss, ref)

    print("KERNEL_OK")
</pallas_src>

<mosaic_0001>
module attributes {stable_mosaic.version = 11 : i64} {
  func.func @_kl_partial_kernel(%arg0: i32, %arg1: memref<8x1536xf32, #tpu.memory_space<vmem>>, %arg2: memref<8x1536xf32, #tpu.memory_space<vmem>>, %arg3: memref<8x1536xf32, #tpu.memory_space<vmem>>, %arg4: memref<8x1536xf32, #tpu.memory_space<vmem>>, %arg5: memref<1x8x1536xf32, #tpu.memory_space<vmem>>) attributes {dimension_semantics = [#tpu.dimension_semantics<parallel>], iteration_bounds = array<i64: 1>, scalar_prefetch = 0 : i64, scratch_operands = 0 : i64, tpu.core_type = #tpu.core_type<tc>, window_params = [{transform_indices = @transform_0, window_bounds = array<i64: 8, 1536>}, {transform_indices = @transform_1, window_bounds = array<i64: 8, 1536>}, {transform_indices = @transform_2, window_bounds = array<i64: 8, 1536>}, {transform_indices = @transform_3, window_bounds = array<i64: 8, 1536>}, {transform_indices = @transform_4, window_bounds = array<i64: 1, 8, 1536>}]} {
    %c0 = arith.constant 0 : index
    %c0_0 = arith.constant 0 : index
    %0 = vector.load %arg1[%c0, %c0_0] : memref<8x1536xf32, #tpu.memory_space<vmem>>, vector<8x1536xf32>
    %c0_1 = arith.constant 0 : index
    %c0_2 = arith.constant 0 : index
    %1 = vector.load %arg2[%c0_1, %c0_2] : memref<8x1536xf32, #tpu.memory_space<vmem>>, vector<8x1536xf32>
    %c0_3 = arith.constant 0 : index
    %c0_4 = arith.constant 0 : index
    %2 = vector.load %arg3[%c0_3, %c0_4] : memref<8x1536xf32, #tpu.memory_space<vmem>>, vector<8x1536xf32>
    %c0_5 = arith.constant 0 : index
    %c0_6 = arith.constant 0 : index
    %3 = vector.load %arg4[%c0_5, %c0_6] : memref<8x1536xf32, #tpu.memory_space<vmem>>, vector<8x1536xf32>
    %4 = tpu.reciprocal %3 : vector<8x1536xf32> -> vector<8x1536xf32>
    %5 = arith.mulf %1, %4 : vector<8x1536xf32>
    %6 = arith.mulf %5, %5 : vector<8x1536xf32>
    %7 = arith.subf %0, %2 : vector<8x1536xf32>
    %8 = arith.mulf %7, %4 : vector<8x1536xf32>
    %9 = arith.mulf %8, %8 : vector<8x1536xf32>
    %10 = arith.addf %6, %9 : vector<8x1536xf32>
    %cst = arith.constant 1.000000e+00 : f32
    %11 = vector.broadcast %cst : f32 to vector<8x1536xf32>
    %12 = arith.subf %10, %11 : vector<8x1536xf32>
    %13 = math.log %6 : vector<8x1536xf32>
    %14 = arith.subf %12, %13 : vector<8x1536xf32>
    %cst_7 = arith.constant 5.000000e-01 : f32
    %15 = vector.broadcast %cst_7 : f32 to vector<8x1536xf32>
    %16 = arith.mulf %15, %14 : vector<8x1536xf32>
    %c0_8 = arith.constant 0 : index
    %c0_9 = arith.constant 0 : index
    %c0_10 = arith.constant 0 : index
    %17 = vector.load %arg5[%c0_8, %c0_9, %c0_10] : memref<1x8x1536xf32, #tpu.memory_space<vmem>>, vector<1x8x1536xf32>
    %18 = vector.shape_cast %17 : vector<1x8x1536xf32> to vector<8x1536xf32>
    %19 = vector.shape_cast %16 : vector<8x1536xf32> to vector<1x8x1536xf32>
    tpu.vector_store %arg5[%c0_8, %c0_9, %c0_10], %19 {strides = array<i32>} : memref<1x8x1536xf32, #tpu.memory_space<vmem>>, vector<1x8x1536xf32>,
    return
  }
  func.func @transform_0(%arg0: i32) -> (i32, i32) {
    %c0_i32 = arith.constant 0 : i32
    %c0_i32_0 = arith.constant 0 : i32
    return %c0_i32, %arg0 : i32, i32
  }
  func.func @transform_1(%arg0: i32) -> (i32, i32) {
    %c0_i32 = arith.constant 0 : i32
    %c0_i32_0 = arith.constant 0 : i32
    return %c0_i32, %arg0 : i32, i32
  }
  func.func @transform_2(%arg0: i32) -> (i32, i32) {
    %c0_i32 = arith.constant 0 : i32
    %c0_i32_0 = arith.constant 0 : i32
    return %c0_i32, %arg0 : i32, i32
  }
  func.func @transform_3(%arg0: i32) -> (i32, i32) {
    %c0_i32 = arith.constant 0 : i32
    %c0_i32_0 = arith.constant 0 : i32
    return %c0_i32, %arg0 : i32, i32
  }
  func.func @transform_4(%arg0: i32) -> (i32, i32, i32) {
    %c0_i32 = arith.constant 0 : i32
    %c0_i32_0 = arith.constant 0 : i32
    %c0_i32_1 = arith.constant 0 : i32
    return %arg0, %c0_i32, %c0_i32_0 : i32, i32, i32
  }
}

</mosaic_0001>

<llo_original>
// kernel: tpu_custom_call.1
$region0: #{tpu_custom_call.1}
  #allocation0 [shape = 'u32[]', space=smem, size = 0x4, offset = 0x4, fixed_abs, tag = 'smem constant byte address 0x4 - core index']
  #allocation1 [shape = 'u32[144,128]{1,0:T(1,128)}', space=vmem, size = 0x12000, scoped, tag = 'internal scratch']
  %s0 = inlined_call_operand.hbm [shape: f32[8,1536], index: 0, kind: input, shape index: {}]
  %s1 = inlined_call_operand.hbm [shape: f32[8,1536], index: 1, kind: input, shape index: {}]
  %s2 = inlined_call_operand.hbm [shape: f32[8,1536], index: 2, kind: input, shape index: {}]
  %s3 = inlined_call_operand.hbm [shape: f32[8,1536], index: 3, kind: input, shape index: {}]
  %s4 = inlined_call_operand.hbm [shape: f32[1,8,1536], index: 4, kind: output, shape index: {}]
  %s5 = sld [smem:[#allocation0]]
  $region42: #{tpu_custom_call.1} parent=0
    _
  %s7 = ssub.s32 1, %s5
  %s8 = scalar_select 0, %s7, %s5
  $region1: #{tpu_custom_call.1} parent=0
    #allocation2 [shape = 'u8[49152]{0}', space=vmem, size = 0xc000, scoped, tag = 'input window, operand 0, single buffered']
    #allocation3 [shape = 's32[1]{0}', space=sflag, size = 0x4, scoped, tag = 'scoped memory for tpu_custom_call.1']
    #allocation4 [shape = 's32[1]{0}', space=sflag, size = 0x4, scoped, tag = 'scoped memory for tpu_custom_call.1']
    #allocation5 [shape = 'u8[49152]{0}', space=vmem, size = 0xc000, scoped, tag = 'input window, operand 1, single buffered']
    #allocation6 [shape = 's32[1]{0}', space=sflag, size = 0x4, scoped, tag = 'scoped memory for tpu_custom_call.1']
    #allocation7 [shape = 'u8[49152]{0}', space=vmem, size = 0xc000, scoped, tag = 'input window, operand 2, single buffered']
    #allocation8 [shape = 'u8[49152]{0}', space=vmem, size = 0xc000, scoped, tag = 'input window, operand 3, single buffered']
    #allocation9 [shape = 's32[1]{0}', space=sflag, size = 0x4, scoped, tag = 'scoped memory for tpu_custom_call.1']
    #allocation10 [shape = 'u8[49152]{0}', space=vmem, size = 0xc000, scoped, tag = 'output window, operand 0, single buffered']
    %9 = vsyncpa [#allocation3], 0
    %10 = vsyncpa [#allocation6], 0
    %11 = vsyncpa [#allocation9], 0
    %12 = vsyncpa [#allocation4], 0
    // Predicated region
    $region2: #{tpu_custom_call.1} parent=1 // pred_check
      _
    $region3: #{tpu_custom_call.1} parent=1 // pred_check_branch
      %14 = sbr.rel (0) target = $region5
    $region4: #{tpu_custom_call.1} parent=1 // pred_region
      %s16 = ssub.s32 1536, 1536
      %17 = vsyncadd [#allocation3], %s16
      %s19 = sshll.u32 [#allocation2], 4
      %s20 = int_to_ptr.vmem [resolvable:$true] %s19
      %22 = dma.hbm_to_vmem [thread:$0]  %s0, 1536, %s20, [#allocation3]
    $region5: #{tpu_custom_call.1} parent=1 // pred_fallthru
      _
    // Predicated region
    $region6: #{tpu_custom_call.1} parent=1 // pred_check
      _
    $region7: #{tpu_custom_call.1} parent=1 // pred_check_branch
      %24 = sbr.rel (0) target = $region9
    $region8: #{tpu_custom_call.1} parent=1 // pred_region
      %s26 = ssub.s32 1536, 1536
      %27 = vsyncadd [#allocation6], %s26
      %s29 = sshll.u32 [#allocation5], 4
      %s30 = int_to_ptr.vmem [resolvable:$true] %s29
      %32 = dma.hbm_to_vmem [thread:$0]  %s1, 1536, %s30, [#allocation6]
    $region9: #{tpu_custom_call.1} parent=1 // pred_fallthru
      _
    // Predicated region
    $region10: #{tpu_custom_call.1} parent=1 // pred_check
      _
    $region11: #{tpu_custom_call.1} parent=1 // pred_check_branch
      %34 = sbr.rel (0) target = $region13
    $region12: #{tpu_custom_call.1} parent=1 // pred_region
      %s36 = ssub.s32 1536, 1536
      %37 = vsyncadd [#allocation6], %s36
      %s39 = sshll.u32 [#allocation7], 4
      %s40 = int_to_ptr.vmem [resolvable:$true] %s39
      %42 = dma.hbm_to_vmem [thread:$0]  %s2, 1536, %s40, [#allocation6]
    $region13: #{tpu_custom_call.1} parent=1 // pred_fallthru
      _
    // Predicated region
    $region14: #{tpu_custom_call.1} parent=1 // pred_check
      _
    $region15: #{tpu_custom_call.1} parent=1 // pred_check_branch
      %44 = sbr.rel (0) target = $region17
    $region16: #{tpu_custom_call.1} parent=1 // pred_region
      %s46 = ssub.s32 1536, 1536
      %47 = vsyncadd [#allocation9], %s46
      %s49 = sshll.u32 [#allocation8], 4
      %s50 = int_to_ptr.vmem [resolvable:$true] %s49
      %52 = dma.hbm_to_vmem [thread:$0]  %s3, 1536, %s50, [#allocation9]
    $region17: #{tpu_custom_call.1} parent=1 // pred_fallthru
      _
    // Predicated region
    $region18: #{tpu_custom_call.1} parent=1 // pred_check
      _
    $region19: #{tpu_custom_call.1} parent=1 // pred_check_branch
      %54 = sbr.rel (0) target = $region21
    $region20: #{tpu_custom_call.1} parent=1 // pred_region
      %55 = dma.done [#allocation3], 1536
    $region21: #{tpu_custom_call.1} parent=1 // pred_fallthru
      _
    // Predicated region
    $region22: #{tpu_custom_call.1} parent=1 // pred_check
      _
    $region23: #{tpu_custom_call.1} parent=1 // pred_check_branch
      %57 = sbr.rel (0) target = $region25
    $region24: #{tpu_custom_call.1} parent=1 // pred_region
      %58 = dma.done [#allocation6], 1536
    $region25: #{tpu_custom_call.1} parent=1 // pred_fallthru
      _
    // Predicated region
    $region26: #{tpu_custom_call.1} parent=1 // pred_check
      _
    $region27: #{tpu_custom_call.1} parent=1 // pred_check_branch
      %60 = sbr.rel (0) target = $region29
    $region28: #{tpu_custom_call.1} parent=1 // pred_region
      %61 = dma.done [#allocation6], 1536
    $region29: #{tpu_custom_call.1} parent=1 // pred_fallthru
      _
    // Predicated region
    $region30: #{tpu_custom_call.1} parent=1 // pred_check
      _
    $region31: #{tpu_custom_call.1} parent=1 // pred_check_branch
      %63 = sbr.rel (0) target = $region33
    $region32: #{tpu_custom_call.1} parent=1 // pred_region
      %64 = dma.done [#allocation9], 1536
    $region33: #{tpu_custom_call.1} parent=1 // pred_fallthru
      _
    %v65 = vld [vmem:[#allocation2] sm:$0xff]
    %v66 = vld [vmem:[#allocation2 + $0x8] sm:$0xff]
    %v67 = vld [vmem:[#allocation2 + $0x10] sm:$0xff]
    %v68 = vld [vmem:[#allocation2 + $0x18] sm:$0xff]
    %v69 = vld [vmem:[#allocation2 + $0x20] sm:$0xff]
    %v70 = vld [vmem:[#allocation2 + $0x28] sm:$0xff]
    %v71 = vld [vmem:[#allocation2 + $0x30] sm:$0xff]
    %v72 = vld [vmem:[#allocation2 + $0x38] sm:$0xff]
    %v73 = vld [vmem:[#allocation2 + $0x40] sm:$0xff]
    %v74 = vld [vmem:[#allocation2 + $0x48] sm:$0xff]
    %v75 = vld [vmem:[#allocation2 + $0x50] sm:$0xff]
    %v76 = vld [vmem:[#allocation2 + $0x58] sm:$0xff]
    %v77 = vld [vmem:[#allocation5] sm:$0xff]
    %v78 = vld [vmem:[#allocation5 + $0x8] sm:$0xff]
    %v79 = vld [vmem:[#allocation5 + $0x10] sm:$0xff]
    %v80 = vld [vmem:[#allocation5 + $0x18] sm:$0xff]
    %v81 = vld [vmem:[#allocation5 + $0x20] sm:$0xff]
    %v82 = vld [vmem:[#allocation5 + $0x28] sm:$0xff]
    %v83 = vld [vmem:[#allocation5 + $0x30] sm:$0xff]
    %v84 = vld [vmem:[#allocation5 + $0x38] sm:$0xff]
    %v85 = vld [vmem:[#allocation5 + $0x40] sm:$0xff]
    %v86 = vld [vmem:[#allocation5 + $0x48] sm:$0xff]
    %v87 = vld [vmem:[#allocation5 + $0x50] sm:$0xff]
    %v88 = vld [vmem:[#allocation5 + $0x58] sm:$0xff]
    %v89 = vld [vmem:[#allocation7] sm:$0xff]
    %v90 = vld [vmem:[#allocation7 + $0x8] sm:$0xff]
    %v91 = vld [vmem:[#allocation7 + $0x10] sm:$0xff]
    %v92 = vld [vmem:[#allocation7 + $0x18] sm:$0xff]
    %v93 = vld [vmem:[#allocation7 + $0x20] sm:$0xff]
    %v94 = vld [vmem:[#allocation7 + $0x28] sm:$0xff]
    %v95 = vld [vmem:[#allocation7 + $0x30] sm:$0xff]
    %v96 = vld [vmem:[#allocation7 + $0x38] sm:$0xff]
    %v97 = vld [vmem:[#allocation7 + $0x40] sm:$0xff]
    %v98 = vld [vmem:[#allocation7 + $0x48] sm:$0xff]
    %v99 = vld [vmem:[#allocation7 + $0x50] sm:$0xff]
    %v100 = vld [vmem:[#allocation7 + $0x58] sm:$0xff]
    %v101 = vld [vmem:[#allocation8] sm:$0xff]
    %v102 = vld [vmem:[#allocation8 + $0x8] sm:$0xff]
    %v103 = vld [vmem:[#allocation8 + $0x10] sm:$0xff]
    %v104 = vld [vmem:[#allocation8 + $0x18] sm:$0xff]
    %v105 = vld [vmem:[#allocation8 + $0x20] sm:$0xff]
    %v106 = vld [vmem:[#allocation8 + $0x28] sm:$0xff]
    %v107 = vld [vmem:[#allocation8 + $0x30] sm:$0xff]
    %v108 = vld [vmem:[#allocation8 + $0x38] sm:$0xff]
    %v109 = vld [vmem:[#allocation8 + $0x40] sm:$0xff]
    %v110 = vld [vmem:[#allocation8 + $0x48] sm:$0xff]
    %v111 = vld [vmem:[#allocation8 + $0x50] sm:$0xff]
    %v112 = vld [vmem:[#allocation8 + $0x58] sm:$0xff]
    %v113 = vrcp.pop %v101
    %v114 = vrcp.pop %v102
    %v115 = vrcp.pop %v103
    %v116 = vrcp.pop %v104
    %v117 = vrcp.pop %v105
    %v118 = vrcp.pop %v106
    %v119 = vrcp.pop %v107
    %v120 = vrcp.pop %v108
    %v121 = vrcp.pop %v109
    %v122 = vrcp.pop %v110
    %v123 = vrcp.pop %v111
    %v124 = vrcp.pop %v112
    %v125 = vmul.f32 %v77, %v113
    %v126 = vmul.f32 %v78, %v114
    %v127 = vmul.f32 %v79, %v115
    %v128 = vmul.f32 %v80, %v116
    %v129 = vmul.f32 %v81, %v117
    %v130 = vmul.f32 %v82, %v118
    %v131 = vmul.f32 %v83, %v119
    %v132 = vmul.f32 %v84, %v120
    %v133 = vmul.f32 %v85, %v121
    %v134 = vmul.f32 %v86, %v122
    %v135 = vmul.f32 %v87, %v123
    %v136 = vmul.f32 %v88, %v124
    %v137 = vmul.f32 %v125, %v125
    %v138 = vmul.f32 %v126, %v126
    %v139 = vmul.f32 %v127, %v127
    %v140 = vmul.f32 %v128, %v128
    %v141 = vmul.f32 %v129, %v129
    %v142 = vmul.f32 %v130, %v130
    %v143 = vmul.f32 %v131, %v131
    %v144 = vmul.f32 %v132, %v132
    %v145 = vmul.f32 %v133, %v133
    %v146 = vmul.f32 %v134, %v134
    %v147 = vmul.f32 %v135, %v135
    %v148 = vmul.f32 %v136, %v136
    %v149 = vsub.f32 %v65, %v89
    %v150 = vsub.f32 %v66, %v90
    %v151 = vsub.f32 %v67, %v91
    %v152 = vsub.f32 %v68, %v92
    %v153 = vsub.f32 %v69, %v93
    %v154 = vsub.f32 %v70, %v94
    %v155 = vsub.f32 %v71, %v95
    %v156 = vsub.f32 %v72, %v96
    %v157 = vsub.f32 %v73, %v97
    %v158 = vsub.f32 %v74, %v98
    %v159 = vsub.f32 %v75, %v99
    %v160 = vsub.f32 %v76, %v100
    %v161 = vmul.f32 %v149, %v113
    %v162 = vmul.f32 %v150, %v114
    %v163 = vmul.f32 %v151, %v115
    %v164 = vmul.f32 %v152, %v116
    %v165 = vmul.f32 %v153, %v117
    %v166 = vmul.f32 %v154, %v118
    %v167 = vmul.f32 %v155, %v119
    %v168 = vmul.f32 %v156, %v120
    %v169 = vmul.f32 %v157, %v121
    %v170 = vmul.f32 %v158, %v122
    %v171 = vmul.f32 %v159, %v123
    %v172 = vmul.f32 %v160, %v124
    %v173 = vmul.f32 %v161, %v161
    %v174 = vmul.f32 %v162, %v162
    %v175 = vmul.f32 %v163, %v163
    %v176 = vmul.f32 %v164, %v164
    %v177 = vmul.f32 %v165, %v165
    %v178 = vmul.f32 %v166, %v166
    %v179 = vmul.f32 %v167, %v167
    %v180 = vmul.f32 %v168, %v168
    %v181 = vmul.f32 %v169, %v169
    %v182 = vmul.f32 %v170, %v170
    %v183 = vmul.f32 %v171, %v171
    %v184 = vmul.f32 %v172, %v172
    %v185 = vadd.f32 %v137, %v173
    %v186 = vadd.f32 %v138, %v174
    %v187 = vadd.f32 %v139, %v175
    %v188 = vadd.f32 %v140, %v176
    %v189 = vadd.f32 %v141, %v177
    %v190 = vadd.f32 %v142, %v178
    %v191 = vadd.f32 %v143, %v179
    %v192 = vadd.f32 %v144, %v180
    %v193 = vadd.f32 %v145, %v181
    %v194 = vadd.f32 %v146, %v182
    %v195 = vadd.f32 %v147, %v183
    %v196 = vadd.f32 %v148, %v184
    %v197 = vsub.f32 %v185, 1.0
    %v198 = vsub.f32 %v186, 1.0
    %v199 = vsub.f32 %v187, 1.0
    %v200 = vsub.f32 %v188, 1.0
    %v201 = vsub.f32 %v189, 1.0
    %v202 = vsub.f32 %v190, 1.0
    %v203 = vsub.f32 %v191, 1.0
    %v204 = vsub.f32 %v192, 1.0
    %v205 = vsub.f32 %v193, 1.0
    %v206 = vsub.f32 %v194, 1.0
    %v207 = vsub.f32 %v195, 1.0
    %v208 = vsub.f32 %v196, 1.0
    %v209 = vlog2.pop %v137
    %v210 = vmul.f32 %v209, 0.6931472
    %v211 = vlog2.pop %v138
    %v212 = vmul.f32 %v211, 0.6931472
    %v213 = vlog2.pop %v139
    %v214 = vmul.f32 %v213, 0.6931472
    %v215 = vlog2.pop %v140
    %v216 = vmul.f32 %v215, 0.6931472
    %v217 = vlog2.pop %v141
    %v218 = vmul.f32 %v217, 0.6931472
    %v219 = vlog2.pop %v142
    %v220 = vmul.f32 %v219, 0.6931472
    %v221 = vlog2.pop %v143
    %v222 = vmul.f32 %v221, 0.6931472
    %v223 = vlog2.pop %v144
    %v224 = vmul.f32 %v223, 0.6931472
    %v225 = vlog2.pop %v145
    %v226 = vmul.f32 %v225, 0.6931472
    %v227 = vlog2.pop %v146
    %v228 = vmul.f32 %v227, 0.6931472
    %v229 = vlog2.pop %v147
    %v230 = vmul.f32 %v229, 0.6931472
    %v231 = vlog2.pop %v148
    %v232 = vmul.f32 %v231, 0.6931472
    %v233 = vsub.f32 %v197, %v210
    %v234 = vsub.f32 %v198, %v212
    %v235 = vsub.f32 %v199, %v214
    %v236 = vsub.f32 %v200, %v216
    %v237 = vsub.f32 %v201, %v218
    %v238 = vsub.f32 %v202, %v220
    %v239 = vsub.f32 %v203, %v222
    %v240 = vsub.f32 %v204, %v224
    %v241 = vsub.f32 %v205, %v226
    %v242 = vsub.f32 %v206, %v228
    %v243 = vsub.f32 %v207, %v230
    %v244 = vsub.f32 %v208, %v232
    %v245 = vmul.f32 %v233, 0.5
    %v246 = vmul.f32 %v234, 0.5
    %v247 = vmul.f32 %v235, 0.5
    %v248 = vmul.f32 %v236, 0.5
    %v249 = vmul.f32 %v237, 0.5
    %v250 = vmul.f32 %v238, 0.5
    %v251 = vmul.f32 %v239, 0.5
    %v252 = vmul.f32 %v240, 0.5
    %v253 = vmul.f32 %v241, 0.5
    %v254 = vmul.f32 %v242, 0.5
    %v255 = vmul.f32 %v243, 0.5
    %v256 = vmul.f32 %v244, 0.5
    %257 = vst [vmem:[#allocation10] sm:$0xff] %v245
    %258 = vst [vmem:[#allocation10 + $0x8] sm:$0xff] %v246
    %259 = vst [vmem:[#allocation10 + $0x10] sm:$0xff] %v247
    %260 = vst [vmem:[#allocation10 + $0x18] sm:$0xff] %v248
    %261 = vst [vmem:[#allocation10 + $0x20] sm:$0xff] %v249
    %262 = vst [vmem:[#allocation10 + $0x28] sm:$0xff] %v250
    %263 = vst [vmem:[#allocation10 + $0x30] sm:$0xff] %v251
    %264 = vst [vmem:[#allocation10 + $0x38] sm:$0xff] %v252
    %265 = vst [vmem:[#allocation10 + $0x40] sm:$0xff] %v253
    %266 = vst [vmem:[#allocation10 + $0x48] sm:$0xff] %v254
    %267 = vst [vmem:[#allocation10 + $0x50] sm:$0xff] %v255
    %268 = vst [vmem:[#allocation10 + $0x58] sm:$0xff] %v256
    // Predicated region
    $region34: #{tpu_custom_call.1} parent=1 // pred_check
      _
    $region35: #{tpu_custom_call.1} parent=1 // pred_check_branch
      %270 = sbr.rel (0) target = $region37
    $region36: #{tpu_custom_call.1} parent=1 // pred_region
      %s272 = ssub.s32 1536, 1536
      %273 = vsyncadd [#allocation4], %s272
      %s275 = sshll.u32 [#allocation10], 4
      %s276 = int_to_ptr.vmem [resolvable:$true] %s275
      %278 = dma.vmem_to_hbm [thread:$0]  %s276, 1536, %s4, [#allocation4]
    $region37: #{tpu_custom_call.1} parent=1 // pred_fallthru
      _
    // Predicated region
    $region38: #{tpu_custom_call.1} parent=1 // pred_check
      _
    $region39: #{tpu_custom_call.1} parent=1 // pred_check_branch
      %280 = sbr.rel (0) target = $region41
    $region40: #{tpu_custom_call.1} parent=1 // pred_region
      %281 = dma.done [#allocation4], 1536
    $region41: #{tpu_custom_call.1} parent=1 // pred_fallthru
      _
    %282 = vsyncpa [#allocation3], 1
    %283 = vsyncpa [#allocation6], 1
    %284 = vsyncpa [#allocation9], 1
    %285 = vsyncpa [#allocation4], 1

</llo_original>
